<compile_context>
chip_gen: v6e
topology: v6e:2x2x1
jax: 0.10.0
libtpu: 0.0.40
codegen_flags: <defaults>
</compile_context>

<pallas_src>
import jax
import jax.numpy as jnp
from jax.experimental import pallas as pl
from jax.experimental.pallas import tpu as pltpu

_MIB = 1 << 20
_STEP_BUDGET_BYTES = 12 * _MIB   # per-grid-step (inputs + output) VMEM footprint target
_VMEM_HEADROOM = 4 * _MIB        # slack for Mosaic internal scratch / semaphores


def _concat_channels_kernel(*refs):
    """refs = (*in_refs, out_ref); in_ref i is (C_i, sub, lane), out is (C_total, sub, lane)."""
    *in_refs, o_ref = refs
    off = 0
    for r in in_refs:
        c = r.shape[0]
        # The channel offset indexes a leading (non-sublane/lane) axis, so every
        # store is a full dense (sub, lane) tile regardless of C_i.  The dtype
        # promotion is fused here: a free VPU cast hidden under the DMA.
        o_ref[off:off + c, :, :] = r[...].astype(o_ref.dtype)
        off += c


def _vmem_capacity_bytes():
    try:
        return int(getattr(pltpu.get_tpu_info(), "vmem_capacity_bytes", 64 * _MIB))
    except Exception:
        return 64 * _MIB   # assume the smallest generation (v7x per-TC) if unknown


def _plan_tiling(hw_pad, per_col_bytes, n_batch):
    """hw_pad % 128 == 0.  Returns (n_chunks, sub, lane) with n_chunks*sub*lane == hw_pad,
    lane a multiple of 128, and sub == 8 (dense f32 sublane packing) whenever possible."""
    divs = [d for d in range(128, hw_pad + 1, 128) if hw_pad % d == 0]
    fitting = [d for d in divs if d * per_col_bytes <= _STEP_BUDGET_BYTES]
    ch = max(fitting) if fitting else min(divs)
    # v7x megacore: with batch == 1 make sure there are >= 2 grid steps so both
    # TensorCores get work (measured no-op on v5e/v6e, harmless there).
    if (n_batch == 1 and ch == hw_pad and len(divs) > 1
            and hw_pad * per_col_bytes > 2 * _MIB):
        smaller = [d for d in divs if d < hw_pad]
        small_fit = [d for d in smaller if d * per_col_bytes <= _STEP_BUDGET_BYTES]
        ch = max(small_fit) if small_fit else max(smaller)
    q = ch // 128
    if q % 8 == 0:
        sub = 8                                   # dense tiles + widest possible lane dim
    else:
        sub = max(d for d in range(1, min(q, 8) + 1) if q % d == 0)
    return hw_pad // ch, sub, ch // sub


def correspondence_map_forward(x1, x2=None, x3=None):
    """Pallas equivalent of CorrespondenceMapBase.forward (NCHW, concat on dim=1)."""
    inputs = [x for x in (x1, x2, x3) if x is not None]
    if len(inputs) == 1:
        # No concatenation needed; forward returns x1 unchanged.
        return x1

    if any(x.ndim != 4 for x in inputs):
        raise ValueError("All inputs to CorrespondenceMapBase must be 4-D NCHW.")
    N, _, H, W = x1.shape
    for i, x in enumerate(inputs[1:], start=2):
        if x.shape[0] != N or x.shape[2] != H or x.shape[3] != W:
            raise ValueError(
                f"Input {i} has shape {tuple(x.shape)}; expected batch/spatial "
                f"dims ({N}, *, {H}, {W}) matching x1.")

    # torch.cat type promotion: output dtype is the promoted dtype, but the cast
    # happens inside the kernel (no extra HBM round-trip for promoted inputs).
    out_dtype = jnp.result_type(*(x.dtype for x in inputs))
    channels = [int(x.shape[1]) for x in inputs]
    c_total = sum(channels)
    hw = H * W
    hw_pad = ((hw + 127) // 128) * 128   # lane-dense fallback for odd spatial sizes

    out_itemsize = jnp.dtype(out_dtype).itemsize
    in_itemsizes = [jnp.dtype(x.dtype).itemsize for x in inputs]
    per_col_bytes = (sum(c * s for c, s in zip(channels, in_itemsizes))
                     + c_total * out_itemsize)

    n_chunks, sub, lane = _plan_tiling(hw_pad, per_col_bytes, N)
    ch = sub * lane

    # Flatten spatial dims (free for contiguous NCHW); only the rare non-128-multiple
    # case pays for a pad + post-slice, in exchange for lane-dense, VMEM-bounded tiles.
    views = []
    for x, c in zip(inputs, channels):
        flat = x.reshape(N, c, hw)
        if hw_pad != hw:
            flat = jnp.pad(flat, ((0, 0), (0, 0), (0, hw_pad - hw)))
        views.append(flat.reshape(N, c, n_chunks, sub, lane))

    in_specs = [
        pl.BlockSpec((None, c, None, sub, lane), lambda n, j: (n, 0, j, 0, 0))
        for c in channels
    ]
    out_spec = pl.BlockSpec((None, c_total, None, sub, lane),
                            lambda n, j: (n, 0, j, 0, 0))

    cp_kwargs = dict(dimension_semantics=("parallel", "parallel"))
    step_bytes = ch * per_col_bytes
    needed = 2 * step_bytes + _VMEM_HEADROOM   # double-buffered pipeline + scratch slack
    if needed > 16 * _MIB:                     # smallest default scoped limit (v5e)
        # Leave headroom below physical VMEM (v7x: 64 MiB per TC -> cap at 48 MiB).
        safe_cap = max(_vmem_capacity_bytes() - 16 * _MIB, 32 * _MIB)
        cp_kwargs["vmem_limit_bytes"] = int(min(needed, safe_cap))

    out5 = pl.pallas_call(
        _concat_channels_kernel,
        out_shape=jax.ShapeDtypeStruct((N, c_total, n_chunks, sub, lane), out_dtype),
        grid=(N, n_chunks),
        in_specs=in_specs,
        out_specs=out_spec,
        compiler_params=pltpu.CompilerParams(**cp_kwargs),
    )(*views)

    out = out5.reshape(N, c_total, hw_pad)
    if hw_pad != hw:
        out = out[:, :, :hw]
    return out.reshape(N, c_total, H, W)


if __name__ == "__main__":
    key = jax.random.PRNGKey(0)
    k1, k2, k3, k4, k5 = jax.random.split(key, 5)

    # Small shapes consistent with the module: batch=2, channels=4, spatial=16.
    x1 = jax.random.normal(k1, (2, 4, 16, 16), dtype=jnp.float32)
    x2 = jax.random.normal(k2, (2, 4, 16, 16), dtype=jnp.float32)
    x3 = jax.random.normal(k3, (2, 4, 16, 16), dtype=jnp.float32)

    # Case: x1, x2, x3 all present -> concat along channels -> (2, 12, 16, 16)
    out123 = jax.block_until_ready(correspondence_map_forward(x1, x2, x3))
    ref123 = jnp.concatenate((x1, x2, x3), axis=1)
    assert out123.shape == (2, 12, 16, 16)
    assert jnp.array_equal(out123, ref123)

    # Case: x1, x2 only -> (2, 8, 16, 16)
    out12 = jax.block_until_ready(correspondence_map_forward(x1, x2))
    assert jnp.array_equal(out12, jnp.concatenate((x1, x2), axis=1))

    # Case: x1, x3 only -> (2, 8, 16, 16)
    out13 = jax.block_until_ready(correspondence_map_forward(x1, x3=x3))
    assert jnp.array_equal(out13, jnp.concatenate((x1, x3), axis=1))

    # Case: x1 only -> identity
    out1 = jax.block_until_ready(correspondence_map_forward(x1))
    assert jnp.array_equal(out1, x1)

    # Mixed dtypes: promotion now fused inside the kernel (matches jnp.concatenate).
    x2_bf16 = x2.astype(jnp.bfloat16)
    out_mix = jax.block_until_ready(correspondence_map_forward(x1, x2_bf16))
    assert out_mix.dtype == jnp.float32
    assert jnp.array_equal(out_mix, jnp.concatenate((x1, x2_bf16), axis=1))

    # Odd spatial size / unequal channel counts (exercises the pad-to-128 fallback).
    xa = jax.random.normal(k4, (2, 3, 5, 6), dtype=jnp.float32)
    xb = jax.random.normal(k5, (2, 5, 5, 6), dtype=jnp.float32)
    out_ab = jax.block_until_ready(correspondence_map_forward(xa, xb))
    assert jnp.array_equal(out_ab, jnp.concatenate((xa, xb), axis=1))

    print("KERNEL_OK")
</pallas_src>

<mosaic_0001>
module attributes {stable_mosaic.version = 11 : i64} {
  func.func @_concat_channels_kernel(%arg0: i32, %arg1: i32, %arg2: memref<1x4x1x2x128xf32, #tpu.memory_space<vmem>>, %arg3: memref<1x4x1x2x128xf32, #tpu.memory_space<vmem>>, %arg4: memref<1x4x1x2x128xf32, #tpu.memory_space<vmem>>, %arg5: memref<1x12x1x2x128xf32, #tpu.memory_space<vmem>>) attributes {dimension_semantics = [#tpu.dimension_semantics<parallel>, #tpu.dimension_semantics<parallel>], iteration_bounds = array<i64: 2, 1>, scalar_prefetch = 0 : i64, scratch_operands = 0 : i64, tpu.core_type = #tpu.core_type<tc>, window_params = [{transform_indices = @transform_0, window_bounds = array<i64: 1, 4, 1, 2, 128>}, {transform_indices = @transform_1, window_bounds = array<i64: 1, 4, 1, 2, 128>}, {transform_indices = @transform_2, window_bounds = array<i64: 1, 4, 1, 2, 128>}, {transform_indices = @transform_3, window_bounds = array<i64: 1, 12, 1, 2, 128>}]} {
    %c0 = arith.constant 0 : index
    %c0_0 = arith.constant 0 : index
    %c0_1 = arith.constant 0 : index
    %c0_2 = arith.constant 0 : index
    %c0_3 = arith.constant 0 : index
    %0 = vector.load %arg2[%c0, %c0_0, %c0_1, %c0_2, %c0_3] : memref<1x4x1x2x128xf32, #tpu.memory_space<vmem>>, vector<1x4x1x2x128xf32>
    %1 = vector.shape_cast %0 : vector<1x4x1x2x128xf32> to vector<4x2x128xf32>
    %c0_4 = arith.constant 0 : index
    %c0_5 = arith.constant 0 : index
    %c0_6 = arith.constant 0 : index
    %c0_7 = arith.constant 0 : index
    %c0_8 = arith.constant 0 : index
    %2 = vector.load %arg5[%c0_4, %c0_5, %c0_6, %c0_7, %c0_8] : memref<1x12x1x2x128xf32, #tpu.memory_space<vmem>>, vector<1x4x1x2x128xf32>
    %3 = vector.shape_cast %2 : vector<1x4x1x2x128xf32> to vector<4x2x128xf32>
    %4 = vector.shape_cast %1 : vector<4x2x128xf32> to vector<1x4x1x2x128xf32>
    tpu.vector_store %arg5[%c0_4, %c0_5, %c0_6, %c0_7, %c0_8], %4 {strides = array<i32>} : memref<1x12x1x2x128xf32, #tpu.memory_space<vmem>>, vector<1x4x1x2x128xf32>,
    %c0_9 = arith.constant 0 : index
    %c0_10 = arith.constant 0 : index
    %c0_11 = arith.constant 0 : index
    %c0_12 = arith.constant 0 : index
    %c0_13 = arith.constant 0 : index
    %5 = vector.load %arg3[%c0_9, %c0_10, %c0_11, %c0_12, %c0_13] : memref<1x4x1x2x128xf32, #tpu.memory_space<vmem>>, vector<1x4x1x2x128xf32>
    %6 = vector.shape_cast %5 : vector<1x4x1x2x128xf32> to vector<4x2x128xf32>
    %c0_14 = arith.constant 0 : index
    %c4 = arith.constant 4 : index
    %c0_15 = arith.constant 0 : index
    %c0_16 = arith.constant 0 : index
    %c0_17 = arith.constant 0 : index
    %7 = vector.load %arg5[%c0_14, %c4, %c0_15, %c0_16, %c0_17] : memref<1x12x1x2x128xf32, #tpu.memory_space<vmem>>, vector<1x4x1x2x128xf32>
    %8 = vector.shape_cast %7 : vector<1x4x1x2x128xf32> to vector<4x2x128xf32>
    %9 = vector.shape_cast %6 : vector<4x2x128xf32> to vector<1x4x1x2x128xf32>
    tpu.vector_store %arg5[%c0_14, %c4, %c0_15, %c0_16, %c0_17], %9 {strides = array<i32>} : memref<1x12x1x2x128xf32, #tpu.memory_space<vmem>>, vector<1x4x1x2x128xf32>,
    %c0_18 = arith.constant 0 : index
    %c0_19 = arith.constant 0 : index
    %c0_20 = arith.constant 0 : index
    %c0_21 = arith.constant 0 : index
    %c0_22 = arith.constant 0 : index
    %10 = vector.load %arg4[%c0_18, %c0_19, %c0_20, %c0_21, %c0_22] : memref<1x4x1x2x128xf32, #tpu.memory_space<vmem>>, vector<1x4x1x2x128xf32>
    %11 = vector.shape_cast %10 : vector<1x4x1x2x128xf32> to vector<4x2x128xf32>
    %c0_23 = arith.constant 0 : index
    %c8 = arith.constant 8 : index
    %c0_24 = arith.constant 0 : index
    %c0_25 = arith.constant 0 : index
    %c0_26 = arith.constant 0 : index
    %12 = vector.load %arg5[%c0_23, %c8, %c0_24, %c0_25, %c0_26] : memref<1x12x1x2x128xf32, #tpu.memory_space<vmem>>, vector<1x4x1x2x128xf32>
    %13 = vector.shape_cast %12 : vector<1x4x1x2x128xf32> to vector<4x2x128xf32>
    %14 = vector.shape_cast %11 : vector<4x2x128xf32> to vector<1x4x1x2x128xf32>
    tpu.vector_store %arg5[%c0_23, %c8, %c0_24, %c0_25, %c0_26], %14 {strides = array<i32>} : memref<1x12x1x2x128xf32, #tpu.memory_space<vmem>>, vector<1x4x1x2x128xf32>,
    return
  }
  func.func @transform_0(%arg0: i32, %arg1: i32) -> (i32, i32, i32, i32, i32) {
    %c0_i32 = arith.constant 0 : i32
    %c0_i32_0 = arith.constant 0 : i32
    %c0_i32_1 = arith.constant 0 : i32
    %c0_i32_2 = arith.constant 0 : i32
    return %arg0, %c0_i32, %arg1, %c0_i32_0, %c0_i32_1 : i32, i32, i32, i32, i32
  }
  func.func @transform_1(%arg0: i32, %arg1: i32) -> (i32, i32, i32, i32, i32) {
    %c0_i32 = arith.constant 0 : i32
    %c0_i32_0 = arith.constant 0 : i32
    %c0_i32_1 = arith.constant 0 : i32
    %c0_i32_2 = arith.constant 0 : i32
    return %arg0, %c0_i32, %arg1, %c0_i32_0, %c0_i32_1 : i32, i32, i32, i32, i32
  }
  func.func @transform_2(%arg0: i32, %arg1: i32) -> (i32, i32, i32, i32, i32) {
    %c0_i32 = arith.constant 0 : i32
    %c0_i32_0 = arith.constant 0 : i32
    %c0_i32_1 = arith.constant 0 : i32
    %c0_i32_2 = arith.constant 0 : i32
    return %arg0, %c0_i32, %arg1, %c0_i32_0, %c0_i32_1 : i32, i32, i32, i32, i32
  }
  func.func @transform_3(%arg0: i32, %arg1: i32) -> (i32, i32, i32, i32, i32) {
    %c0_i32 = arith.constant 0 : i32
    %c0_i32_0 = arith.constant 0 : i32
    %c0_i32_1 = arith.constant 0 : i32
    %c0_i32_2 = arith.constant 0 : i32
    return %arg0, %c0_i32, %arg1, %c0_i32_0, %c0_i32_1 : i32, i32, i32, i32, i32
  }
}

</mosaic_0001>

<llo_original>
// kernel: tpu_custom_call.1
$region0: #{tpu_custom_call.1}
  #allocation0 [shape = 'u32[]', space=smem, size = 0x4, offset = 0x4, fixed_abs, tag = 'smem constant byte address 0x4 - core index']
  #allocation1 [shape = 'u32[144,128]{1,0:T(1,128)}', space=vmem, size = 0x12000, scoped, tag = 'internal scratch']
  %s0 = inlined_call_operand.hbm [shape: f32[2,4,1,2,128], index: 0, kind: input, shape index: {}]
  %s1 = inlined_call_operand.hbm [shape: f32[2,4,1,2,128], index: 1, kind: input, shape index: {}]
  %s2 = inlined_call_operand.hbm [shape: f32[2,4,1,2,128], index: 2, kind: input, shape index: {}]
  %s3 = inlined_call_operand.hbm [shape: f32[2,12,1,2,128], index: 3, kind: output, shape index: {}]
  %s4 = sld [smem:[#allocation0]]
  $region57: #{tpu_custom_call.1} parent=0
    _
  %s6 = ssub.s32 1, %s4
  %s7 = scalar_select 0, %s6, %s4
  $region1: #{tpu_custom_call.1} parent=0
    #allocation2 [shape = 'u8[8192]{0}', space=vmem, size = 0x2000, scoped, tag = 'input window, operand 0']
    #allocation3 [shape = 's32[2]{0}', space=sflag, size = 0x8, scoped, tag = 'scoped memory for tpu_custom_call.1']
    #allocation4 [shape = 's32[2]{0}', space=sflag, size = 0x8, scoped, tag = 'scoped memory for tpu_custom_call.1']
    #allocation5 [shape = 'u8[8192]{0}', space=vmem, size = 0x2000, scoped, tag = 'input window, operand 1']
    #allocation6 [shape = 's32[2]{0}', space=sflag, size = 0x8, scoped, tag = 'scoped memory for tpu_custom_call.1']
    #allocation7 [shape = 'u8[8192]{0}', space=vmem, size = 0x2000, scoped, tag = 'input window, operand 2']
    #allocation8 [shape = 'u8[24576]{0}', space=vmem, size = 0x6000, scoped, tag = 'output window, operand 0']
    %8 = vsyncpa [#allocation3], 0
    %s9 = scalar_lea.sflag [#allocation3], 1
    %10 = vsyncpa %s9, 0
    %11 = vsyncpa [#allocation6], 0
    %s12 = scalar_lea.sflag [#allocation6], 1
    %13 = vsyncpa %s12, 0
    %14 = vsyncpa [#allocation4], 0
    %s15 = scalar_lea.sflag [#allocation4], 1
    %16 = vsyncpa %s15, 0
    loop: start=0, step=1, limit=4
    $region2: #{tpu_custom_call.1} parent=1 // loop_pre_header
      _
    $region3: #{tpu_custom_call.1} parent=1 // loop_header
      %s18 = sphi 0, %s22
      %p19 = scmp.ge.s32.totalorder %s18, 4
      %s25 = sphi 0, %s37
      %s26 = sphi 0, %s33
      %s27 = sphi 0, %s25
      %s28 = sphi 0, %s26
      %s29 = sphi 0, %s27
      %s30 = sphi 0, %s28
      %s42 = sphi 0, %s44
      %s45 = sphi 0, %s42
      %s46 = sphi 0, %s45
      %s62 = sphi 0, %s46
      %s70 = sphi 0, %s72
      %s73 = sphi 0, %s70
      %s74 = sphi 0, %s73
      %s90 = sphi 0, %s74
      %s98 = sphi 0, %s100
      %s101 = sphi 0, %s98
      %s102 = sphi 0, %s101
      %s118 = sphi 0, %s102
      %s126 = sphi 0, %s128
      %s129 = sphi 0, %s126
      %s130 = sphi 0, %s129
      %s146 = sphi 0, %s130
    $region4: #{tpu_custom_call.1} parent=1 // loop_header_branch
      %21 = sbr.rel (%p19) target = $region8
    $region5: #{tpu_custom_call.1} parent=1 // loop_body
      %s23 = ssub.s32 %s18, 1
      %s24 = ssub.s32 %s18, 2
      %s31 = sadd.s32 1, %s26
      %p32 = scmp.ge.s32.totalorder %s31, 1
      %s33 = scalar_select %p32, 0, %s31
      %s34 = sadd.s32 1, %s25
      %s35 = scalar_select %p32, %s34, %s25
      %p36 = scmp.ge.s32.totalorder %s35, 2
      %s37 = scalar_select %p36, 0, %s35
      %s38 = ssub.s32 %s25, %s37
      %s39 = ssub.s32 %s26, %s33
      %s40 = sor.u32 %s38, %s39
      %p41 = scmp.eq.s32.totalorder %s40, 0
      %s43 = sadd.s32 %s42, 1
      %s44 = scalar_select %p41, %s42, %s43
      %p47 = pneg %p41
      %p48 = scmp.eq.s32.totalorder %s18, 1
      %p49 = por %p47, %p48
      %p50 = scmp.ne.s32.totalorder %s42, %s45
      %p51 = scmp.eq.s32.totalorder %s18, 0
      %p52 = por %p50, %p51
      %p53 = scmp.ne.s32.totalorder %s42, %s45
      %p54 = scmp.eq.s32.totalorder %s23, 1
      %p55 = por %p53, %p54
      %p56 = scmp.ne.s32.totalorder %s45, %s46
      %p57 = scmp.eq.s32.totalorder %s23, 0
      %p58 = por %p56, %p57
      %p59 = scmp.ne.s32.totalorder %s45, %s46
      %p60 = scmp.eq.s32.totalorder %s24, 1
      %p61 = por %p59, %p60
      %p63 = scmp.ne.s32.totalorder %s46, %s62
      %p64 = scmp.eq.s32.totalorder %s24, 0
      %p65 = por %p63, %p64
      %s66 = ssub.s32 %s25, %s37
      %s67 = ssub.s32 %s26, %s33
      %s68 = sor.u32 %s66, %s67
      %p69 = scmp.eq.s32.totalorder %s68, 0
      %s71 = sadd.s32 %s70, 1
      %s72 = scalar_select %p69, %s70, %s71
      %p75 = pneg %p69
      %p76 = scmp.eq.s32.totalorder %s18, 1
      %p77 = por %p75, %p76
      %p78 = scmp.ne.s32.totalorder %s70, %s73
      %p79 = scmp.eq.s32.totalorder %s18, 0
      %p80 = por %p78, %p79
      %p81 = scmp.ne.s32.totalorder %s70, %s73
      %p82 = scmp.eq.s32.totalorder %s23, 1
      %p83 = por %p81, %p82
      %p84 = scmp.ne.s32.totalorder %s73, %s74
      %p85 = scmp.eq.s32.totalorder %s23, 0
      %p86 = por %p84, %p85
      %p87 = scmp.ne.s32.totalorder %s73, %s74
      %p88 = scmp.eq.s32.totalorder %s24, 1
      %p89 = por %p87, %p88
      %p91 = scmp.ne.s32.totalorder %s74, %s90
      %p92 = scmp.eq.s32.totalorder %s24, 0
      %p93 = por %p91, %p92
      %s94 = ssub.s32 %s25, %s37
      %s95 = ssub.s32 %s26, %s33
      %s96 = sor.u32 %s94, %s95
      %p97 = scmp.eq.s32.totalorder %s96, 0
      %s99 = sadd.s32 %s98, 1
      %s100 = scalar_select %p97, %s98, %s99
      %p103 = pneg %p97
      %p104 = scmp.eq.s32.totalorder %s18, 1
      %p105 = por %p103, %p104
      %p106 = scmp.ne.s32.totalorder %s98, %s101
      %p107 = scmp.eq.s32.totalorder %s18, 0
      %p108 = por %p106, %p107
      %p109 = scmp.ne.s32.totalorder %s98, %s101
      %p110 = scmp.eq.s32.totalorder %s23, 1
      %p111 = por %p109, %p110
      %p112 = scmp.ne.s32.totalorder %s101, %s102
      %p113 = scmp.eq.s32.totalorder %s23, 0
      %p114 = por %p112, %p113
      %p115 = scmp.ne.s32.totalorder %s101, %s102
      %p116 = scmp.eq.s32.totalorder %s24, 1
      %p117 = por %p115, %p116
      %p119 = scmp.ne.s32.totalorder %s102, %s118
      %p120 = scmp.eq.s32.totalorder %s24, 0
      %p121 = por %p119, %p120
      %s122 = ssub.s32 %s25, %s37
      %s123 = ssub.s32 %s26, %s33
      %s124 = sor.u32 %s122, %s123
      %p125 = scmp.eq.s32.totalorder %s124, 0
      %s127 = sadd.s32 %s126, 1
      %s128 = scalar_select %p125, %s126, %s127
      %p131 = pneg %p125
      %p132 = scmp.eq.s32.totalorder %s18, 1
      %p133 = por %p131, %p132
      %p134 = scmp.ne.s32.totalorder %s126, %s129
      %p135 = scmp.eq.s32.totalorder %s18, 0
      %p136 = por %p134, %p135
      %p137 = scmp.ne.s32.totalorder %s126, %s129
      %p138 = scmp.eq.s32.totalorder %s23, 1
      %p139 = por %p137, %p138
      %p140 = scmp.ne.s32.totalorder %s129, %s130
      %p141 = scmp.eq.s32.totalorder %s23, 0
      %p142 = por %p140, %p141
      %p143 = scmp.ne.s32.totalorder %s129, %s130
      %p144 = scmp.eq.s32.totalorder %s24, 1
      %p145 = por %p143, %p144
      %p147 = scmp.ne.s32.totalorder %s130, %s146
      %p148 = scmp.eq.s32.totalorder %s24, 0
      %p149 = por %p147, %p148
      %p150 = scmp.le.s32.totalorder 1, %s18
      %p151 = scmp.lt.s32.totalorder %s18, 3
      %p152 = pnand %p150, %p151
      %p153 = pneg %p152
      // Predicated region
      $region9: #{tpu_custom_call.1} parent=5 // pred_check
        _
      $region10: #{tpu_custom_call.1} parent=5 // pred_check_branch
        %155 = sbr.rel (%p152) target = $region12
      $region11: #{tpu_custom_call.1} parent=5 // pred_region
        %s156 = ssub.s32 %s18, 1
      $region12: #{tpu_custom_call.1} parent=5 // pred_fallthru
        _
      %p157 = scmp.lt.s32.totalorder %s18, 2
      // Predicated region
      $region13: #{tpu_custom_call.1} parent=5 // pred_check
        %p158 = pneg %p157
      $region14: #{tpu_custom_call.1} parent=5 // pred_check_branch
        %160 = sbr.rel (%p158) target = $region16
      $region15: #{tpu_custom_call.1} parent=5 // pred_region
        // Predicated region
        $region17: #{tpu_custom_call.1} parent=15 // pred_check
          %p161 = pneg %p52
        $region18: #{tpu_custom_call.1} parent=15 // pred_check_branch
          %163 = sbr.rel (%p161) target = $region20
        $region19: #{tpu_custom_call.1} parent=15 // pred_region
          %s164 = sand.u32 %s42, 1
          %s165 = scalar_lea.sflag [#allocation3], %s164
          %s166 = sand.u32 %s42, 1
          %s167 = smul.addr %s166, 8
          %s168 = scalar_lea.vmem [#allocation2], %s167
          %s170 = ssub.s32 128, 128
          %171 = vsyncadd %s165, %s170
          %s172 = smul.addr %s25, 4
          %s173 = sadd.s32 %s26, %s172
          %s174 = smul.addr %s173, 32
          %s175 = scalar_lea.hbm %s0, %s174
          %s176 = sshll.u32 %s168, 4
          %s177 = int_to_ptr.vmem [resolvable:$true] %s176
          %182 = dma.hbm_to_vmem [thread:$0]  %s175, 128, %s177, %s165, 32, 32, 2
        $region20: #{tpu_custom_call.1} parent=15 // pred_fallthru
          _
        // Predicated region
        $region21: #{tpu_custom_call.1} parent=15 // pred_check
          %p183 = pneg %p80
        $region22: #{tpu_custom_call.1} parent=15 // pred_check_branch
          %185 = sbr.rel (%p183) target = $region24
        $region23: #{tpu_custom_call.1} parent=15 // pred_region
          %s186 = sand.u32 %s18, 1
          %s187 = scalar_lea.sflag [#allocation6], %s186
          %s188 = sand.u32 %s70, 1
          %s189 = smul.addr %s188, 8
          %s190 = scalar_lea.vmem [#allocation5], %s189
          %s192 = ssub.s32 128, 128
          %193 = vsyncadd %s187, %s192
          %s194 = smul.addr %s25, 4
          %s195 = sadd.s32 %s26, %s194
          %s196 = smul.addr %s195, 32
          %s197 = scalar_lea.hbm %s1, %s196
          %s198 = sshll.u32 %s190, 4
          %s199 = int_to_ptr.vmem [resolvable:$true] %s198
          %204 = dma.hbm_to_vmem [thread:$0]  %s197, 128, %s199, %s187, 32, 32, 2
        $region24: #{tpu_custom_call.1} parent=15 // pred_fallthru
          _
        // Predicated region
        $region25: #{tpu_custom_call.1} parent=15 // pred_check
          %p205 = pneg %p108
        $region26: #{tpu_custom_call.1} parent=15 // pred_check_branch
          %207 = sbr.rel (%p205) target = $region28
        $region27: #{tpu_custom_call.1} parent=15 // pred_region
          %s208 = sand.u32 %s18, 1
          %s209 = scalar_lea.sflag [#allocation6], %s208
          %s210 = sand.u32 %s98, 1
          %s211 = smul.addr %s210, 8
          %s212 = scalar_lea.vmem [#allocation7], %s211
          %s214 = ssub.s32 128, 128
          %215 = vsyncadd %s209, %s214
          %s216 = smul.addr %s25, 4
          %s217 = sadd.s32 %s26, %s216
          %s218 = smul.addr %s217, 32
          %s219 = scalar_lea.hbm %s2, %s218
          %s220 = sshll.u32 %s212, 4
          %s221 = int_to_ptr.vmem [resolvable:$true] %s220
          %226 = dma.hbm_to_vmem [thread:$0]  %s219, 128, %s221, %s209, 32, 32, 2
        $region28: #{tpu_custom_call.1} parent=15 // pred_fallthru
          _
      $region16: #{tpu_custom_call.1} parent=5 // pred_fallthru
        _
      %p227 = scmp.le.s32.totalorder 1, %s18
      %p228 = scmp.lt.s32.totalorder %s18, 3
      %p229 = pnand %p227, %p228
      %p230 = pneg %p229
      // Predicated region
      $region29: #{tpu_custom_call.1} parent=5 // pred_check
        _
      $region30: #{tpu_custom_call.1} parent=5 // pred_check_branch
        %232 = sbr.rel (%p229) target = $region32
      $region31: #{tpu_custom_call.1} parent=5 // pred_region
        %s233 = ssub.s32 %s18, 1
        %s234 = sand.u32 %s45, 1
        %s235 = scalar_lea.sflag [#allocation3], %s234
        %s236 = sand.u32 %s45, 1
        %s237 = smul.addr %s236, 8
        %s238 = scalar_lea.vmem [#allocation2], %s237
        // Predicated region
        $region33: #{tpu_custom_call.1} parent=31 // pred_check
          %p239 = pneg %p58
        $region34: #{tpu_custom_call.1} parent=31 // pred_check_branch
          %241 = sbr.rel (%p239) target = $region36
        $region35: #{tpu_custom_call.1} parent=31 // pred_region
          %242 = dma.done %s235, 128
        $region36: #{tpu_custom_call.1} parent=31 // pred_fallthru
          _
        %s243 = sand.u32 %s23, 1
        %s244 = scalar_lea.sflag [#allocation6], %s243
        %s245 = sand.u32 %s73, 1
        %s246 = smul.addr %s245, 8
        %s247 = scalar_lea.vmem [#allocation5], %s246
        // Predicated region
        $region37: #{tpu_custom_call.1} parent=31 // pred_check
          %p248 = pneg %p86
        $region38: #{tpu_custom_call.1} parent=31 // pred_check_branch
          %250 = sbr.rel (%p248) target = $region40
        $region39: #{tpu_custom_call.1} parent=31 // pred_region
          %251 = dma.done %s244, 128
        $region40: #{tpu_custom_call.1} parent=31 // pred_fallthru
          _
        %s252 = sand.u32 %s23, 1
        %s253 = scalar_lea.sflag [#allocation6], %s252
        %s254 = sand.u32 %s101, 1
        %s255 = smul.addr %s254, 8
        %s256 = scalar_lea.vmem [#allocation7], %s255
        // Predicated region
        $region41: #{tpu_custom_call.1} parent=31 // pred_check
          %p257 = pneg %p114
        $region42: #{tpu_custom_call.1} parent=31 // pred_check_branch
          %259 = sbr.rel (%p257) target = $region44
        $region43: #{tpu_custom_call.1} parent=31 // pred_region
          %260 = dma.done %s253, 128
        $region44: #{tpu_custom_call.1} parent=31 // pred_fallthru
          _
        %s261 = sand.u32 %s45, 1
        %s262 = scalar_lea.sflag [#allocation3], %s261
        %s263 = sand.u32 %s45, 1
        %s264 = smul.addr %s263, 8
        %s265 = scalar_lea.vmem [#allocation2], %s264
        %p266 = pneg %p58
        %p267 = pneg %p55
        %s268 = sand.u32 %s23, 1
        %s269 = scalar_lea.sflag [#allocation6], %s268
        %s270 = sand.u32 %s73, 1
        %s271 = smul.addr %s270, 8
        %s272 = scalar_lea.vmem [#allocation5], %s271
        %p273 = pneg %p86
        %p274 = pneg %p83
        %s275 = sand.u32 %s23, 1
        %s276 = scalar_lea.sflag [#allocation6], %s275
        %s277 = sand.u32 %s101, 1
        %s278 = smul.addr %s277, 8
        %s279 = scalar_lea.vmem [#allocation7], %s278
        %p280 = pneg %p114
        %p281 = pneg %p111
        %p282 = pneg %p142
        %p283 = pneg %p139
        %s284 = sand.u32 %s129, 1
        %s285 = scalar_lea.sflag [#allocation4], %s284
        %s286 = sand.u32 %s129, 1
        %s287 = smul.addr %s286, 24
        %s288 = scalar_lea.vmem [#allocation8], %s287
        %v289 = vld [vmem:[%s238] sm:$0x3]
        %v290 = vld [vmem:[%s238 + $0x2] sm:$0x3]
        %v291 = vld [vmem:[%s238 + $0x4] sm:$0x3]
        %v292 = vld [vmem:[%s238 + $0x6] sm:$0x3]
        %293 = vst [vmem:[%s288] sm:$0x3] %v289
        %294 = vst [vmem:[%s288 + $0x2] sm:$0x3] %v290
        %295 = vst [vmem:[%s288 + $0x4] sm:$0x3] %v291
        %296 = vst [vmem:[%s288 + $0x6] sm:$0x3] %v292
        %v297 = vld [vmem:[%s247] sm:$0x3]
        %v298 = vld [vmem:[%s247 + $0x2] sm:$0x3]
        %v299 = vld [vmem:[%s247 + $0x4] sm:$0x3]
        %v300 = vld [vmem:[%s247 + $0x6] sm:$0x3]
        %s301 = scalar_lea.vmem %s288, 8 [#allocation8]
        %302 = vst [vmem:[%s301] sm:$0x3] %v297
        %303 = vst [vmem:[%s301 + $0x2] sm:$0x3] %v298
        %304 = vst [vmem:[%s301 + $0x4] sm:$0x3] %v299
        %305 = vst [vmem:[%s301 + $0x6] sm:$0x3] %v300
        %v306 = vld [vmem:[%s256] sm:$0x3]
        %v307 = vld [vmem:[%s256 + $0x2] sm:$0x3]
        %v308 = vld [vmem:[%s256 + $0x4] sm:$0x3]
        %v309 = vld [vmem:[%s256 + $0x6] sm:$0x3]
        %s310 = scalar_lea.vmem %s288, 16 [#allocation8]
        %311 = vst [vmem:[%s310] sm:$0x3] %v306
        %312 = vst [vmem:[%s310 + $0x2] sm:$0x3] %v307
        %313 = vst [vmem:[%s310 + $0x4] sm:$0x3] %v308
        %314 = vst [vmem:[%s310 + $0x6] sm:$0x3] %v309
        %s315 = sand.u32 %s129, 1
        %s316 = scalar_lea.sflag [#allocation4], %s315
        %s317 = sand.u32 %s129, 1
        %s318 = smul.addr %s317, 24
        %s319 = scalar_lea.vmem [#allocation8], %s318
        // Predicated region
        $region45: #{tpu_custom_call.1} parent=31 // pred_check
          %p320 = pneg %p139
        $region46: #{tpu_custom_call.1} parent=31 // pred_check_branch
          %322 = sbr.rel (%p320) target = $region48
        $region47: #{tpu_custom_call.1} parent=31 // pred_region
          %s324 = ssub.s32 384, 384
          %325 = vsyncadd %s316, %s324
          %s326 = smul.addr %s27, 12
          %s327 = sadd.s32 %s28, %s326
          %s328 = smul.addr %s327, 32
          %s329 = scalar_lea.hbm %s3, %s328
          %s330 = sshll.u32 %s319, 4
          %s331 = int_to_ptr.vmem [resolvable:$true] %s330
          %336 = dma.vmem_to_hbm [thread:$0]  %s331, 384, %s329, %s316, 32, 32, 2
        $region48: #{tpu_custom_call.1} parent=31 // pred_fallthru
          _
      $region32: #{tpu_custom_call.1} parent=5 // pred_fallthru
        _
      %p337 = scmp.le.s32.totalorder 2, %s18
      // Predicated region
      $region49: #{tpu_custom_call.1} parent=5 // pred_check
        %p338 = pneg %p337
      $region50: #{tpu_custom_call.1} parent=5 // pred_check_branch
        %340 = sbr.rel (%p338) target = $region52
      $region51: #{tpu_custom_call.1} parent=5 // pred_region
        %s341 = ssub.s32 %s18, 2
        // Predicated region
        $region53: #{tpu_custom_call.1} parent=51 // pred_check
          %p342 = pneg %p145
        $region54: #{tpu_custom_call.1} parent=51 // pred_check_branch
          %344 = sbr.rel (%p342) target = $region56
        $region55: #{tpu_custom_call.1} parent=51 // pred_region
          %s345 = sand.u32 %s130, 1
          %s346 = scalar_lea.sflag [#allocation4], %s345
          %s347 = sand.u32 %s130, 1
          %s348 = smul.addr %s347, 24
          %s349 = scalar_lea.vmem [#allocation8], %s348
          %350 = dma.done %s346, 384
        $region56: #{tpu_custom_call.1} parent=51 // pred_fallthru
          _
      $region52: #{tpu_custom_call.1} parent=5 // pred_fallthru
        _
    $region6: #{tpu_custom_call.1} parent=1 // loop_footer
      %s22 = sadd.s32 1, %s18
    $region7: #{tpu_custom_call.1} parent=1 // loop_footer_branch
      %17 = sbr.rel target = $region3
    $region8: #{tpu_custom_call.1} parent=1 // loop_exit
      _
    %351 = vsyncpa [#allocation3], 1
    %s352 = scalar_lea.sflag [#allocation3], 1
    %353 = vsyncpa %s352, 1
    %354 = vsyncpa [#allocation6], 1
    %s355 = scalar_lea.sflag [#allocation6], 1
    %356 = vsyncpa %s355, 1
    %357 = vsyncpa [#allocation4], 1
    %s358 = scalar_lea.sflag [#allocation4], 1
    %359 = vsyncpa %s358, 1

</llo_original>
